<compile_context>
chip_gen: v6e
topology: v6e:2x2x1
jax: 0.10.0
libtpu: 0.0.40
codegen_flags: <defaults>
</compile_context>

<pallas_src>
import functools

import jax
import jax.numpy as jnp
import numpy as np
from jax.experimental import pallas as pl
from jax.experimental.pallas import tpu as pltpu

LANE = 128


def _round_up(v, m):
    return (v + m - 1) // m * m


# ----------------------------------------------------------------------------
# Pallas kernel: whole forward pass, layer loop unrolled in Python.
# ----------------------------------------------------------------------------
def _stable_sigmoid(y):
    # sigmoid(y) = 0.5 * (tanh(y/2) + 1): tanh runs on the EUP and never
    # overflows, unlike 1/(1+exp(-y)) for large negative y.
    return 0.5 * (jnp.tanh(0.5 * y) + 1.0)


def autoencoder_kernel(x_ref, *refs, layers, n_wbufs):
    """refs = (w_buf_0..w_buf_{n_wbufs-1}, b_pack, o_ref).

    `layers` is a static tuple of (buf_idx, row_off, k_pad, n_pad, act).
    Weight buffers are bf16 with BN already folded; biases are f32.
    """
    w_refs = refs[:n_wbufs]
    b_ref = refs[n_wbufs]
    o_ref = refs[n_wbufs + 1]

    h = x_ref[...]  # (tile, in_pad) f32
    for i, (buf, off, kp, npad, act) in enumerate(layers):
        w = w_refs[buf][off:off + kp, :npad]          # static, tile-aligned slice
        h = jnp.dot(h.astype(jnp.bfloat16), w,        # bf16 MXU path, f32 acc
                    preferred_element_type=jnp.float32)
        h = h + b_ref[i:i + 1, :npad]                  # f32 bias, broadcasts over rows
        if act == "relu":
            h = jnp.maximum(h, 0.0)
        elif act == "sigmoid":
            h = _stable_sigmoid(h)
    o_ref[...] = h.astype(o_ref.dtype)                 # lane-dense (tile, 128) store


def autoencoder_forward(x, packed, *, batch_tile=None):
    """Run the whole autoencoder forward pass as one fused Pallas call."""
    w_bufs = packed["w_bufs"]
    b_pack = packed["b_pack"]
    layers = packed["layers"]
    in_pad = packed["in_pad"]
    out_pad = packed["out_pad"]
    n_out = packed["n_out"]

    B, K = x.shape
    if K < in_pad:
        # Zero-pad input lanes to 128; the padded weight rows are zero anyway.
        x = jnp.pad(x, ((0, 0), (0, in_pad - K)))

    # Tile the batch: up to 256 rows per tile (fills 256x256 MXUs on v6e/v7x,
    # and large batches get >=2 parallel grid steps for megacore sharding).
    if batch_tile is None:
        batch_tile = B if B <= 256 else 256
    assert B % batch_tile == 0, "batch must be divisible by the batch tile"
    grid = (B // batch_tile,)

    in_specs = [pl.BlockSpec((batch_tile, in_pad), lambda i: (i, 0))]
    # Packed weight / bias buffers: whole-array blocks, resident across tiles.
    for wb in w_bufs:
        in_specs.append(pl.BlockSpec(wb.shape, lambda i: (0, 0)))
    in_specs.append(pl.BlockSpec(b_pack.shape, lambda i: (0, 0)))
    out_specs = pl.BlockSpec((batch_tile, out_pad), lambda i: (i, 0))

    kernel = functools.partial(autoencoder_kernel, layers=layers,
                               n_wbufs=len(w_bufs))
    out = pl.pallas_call(
        kernel,
        out_shape=jax.ShapeDtypeStruct((B, out_pad), jnp.float32),
        grid=grid,
        in_specs=in_specs,
        out_specs=out_specs,
        compiler_params=pltpu.CompilerParams(
            dimension_semantics=("parallel",),
            vmem_limit_bytes=32 * 1024 * 1024),
    )(x, *w_bufs, b_pack)
    # Slice off lane padding in the wrapper (kernel writeback stays lane-dense).
    return out[:, :n_out]


# ----------------------------------------------------------------------------
# Deterministic parameter construction (mirrors nn.Linear / nn.BatchNorm1d),
# eval-mode BN folded into the Linear, then packed + cast to bf16.
# ----------------------------------------------------------------------------
def make_linear_params(key, fan_in, fan_out):
    k_w, k_b = jax.random.split(key)
    bound = 1.0 / np.sqrt(fan_in)
    # PyTorch Linear weight is (out, in); stored pre-transposed as (in, out).
    w = jax.random.uniform(k_w, (fan_in, fan_out), jnp.float32, -bound, bound)
    b = jax.random.uniform(k_b, (1, fan_out), jnp.float32, -bound, bound)
    return w, b


def make_bn_fold(num_features, eps=1e-5):
    """Freshly-constructed PyTorch BatchNorm1d in eval mode:
    gamma=1, beta=0, running_mean=0, running_var=1 (parity with the spec)."""
    gamma = jnp.ones((1, num_features), jnp.float32)
    beta = jnp.zeros((1, num_features), jnp.float32)
    running_mean = jnp.zeros((1, num_features), jnp.float32)
    running_var = jnp.ones((1, num_features), jnp.float32)
    scale = gamma / jnp.sqrt(running_var + eps)
    shift = beta - running_mean * scale
    return scale, shift


def build_autoencoder_params(key, input_size, encoding_dim=16):
    # (fan_in, fan_out, has_bn, activation) matching the PyTorch Sequential.
    layer_defs = [
        # encoder
        (input_size, 256, True, "relu"),
        (256, 128, True, "relu"),
        (128, 64, True, "relu"),
        (64, 32, True, "relu"),
        (32, encoding_dim, False, "relu"),
        # decoder
        (encoding_dim, 32, True, "relu"),
        (32, 64, True, "relu"),
        (64, 128, True, "relu"),
        (128, 256, True, "relu"),
        (256, input_size, False, "sigmoid"),
    ]
    raw = []
    for (fan_in, fan_out, has_bn, act) in layer_defs:
        key, k_lin = jax.random.split(key)
        w, b = make_linear_params(k_lin, fan_in, fan_out)
        if has_bn:
            # Fold eval-mode BN into the preceding Linear (in f32):
            #   y = (x@W + b) * scale + shift = x@(W*scale) + (b*scale + shift)
            scale, shift = make_bn_fold(fan_out)
            w = w * scale
            b = b * scale + shift
        raw.append((w, b, act))
    return raw


def pack_autoencoder_params(raw_params, input_size):
    """Zero-pad every weight to (round_up(K,128), round_up(N,128)), group by
    padded width into a few packed bf16 buffers, and pack all biases (f32)
    into one (round_up(L,8), max_width) array."""
    n_layers = len(raw_params)
    widths = sorted({_round_up(w.shape[1], LANE) for (w, _, _) in raw_params})
    width_to_buf = {wd: i for i, wd in enumerate(widths)}
    chunks = [[] for _ in widths]
    rows = [0] * len(widths)
    max_w = max(widths)

    b_pack = jnp.zeros((_round_up(n_layers, 8), max_w), jnp.float32)
    layers = []
    for i, (w, b, act) in enumerate(raw_params):
        K, N = w.shape
        kp, npad = _round_up(K, LANE), _round_up(N, LANE)
        wp = jnp.zeros((kp, npad), jnp.float32).at[:K, :N].set(w)
        buf = width_to_buf[npad]
        layers.append((buf, rows[buf], kp, npad, act))
        chunks[buf].append(wp)
        rows[buf] += kp
        b_pack = b_pack.at[i, :N].set(b[0])

    # BN already folded in f32 above; cast weights to bf16 now (halves the
    # weight DMA and uses the native bf16 MXU path).  Biases stay f32.
    w_bufs = tuple(jnp.concatenate(c, axis=0).astype(jnp.bfloat16)
                   for c in chunks)
    return {
        "w_bufs": w_bufs,
        "b_pack": b_pack,
        "layers": tuple(layers),
        "in_pad": _round_up(input_size, LANE),
        "out_pad": _round_up(raw_params[-1][0].shape[1], LANE),
        "n_out": raw_params[-1][0].shape[1],
    }


# ----------------------------------------------------------------------------
if __name__ == "__main__":
    INPUT_SIZE = 32
    ENCODING_DIM = 16
    BATCH = 8

    root = jax.random.PRNGKey(0)
    k_params, k_x = jax.random.split(root)

    raw_params = build_autoencoder_params(k_params, INPUT_SIZE, ENCODING_DIM)
    packed = pack_autoencoder_params(raw_params, INPUT_SIZE)
    x = jax.random.uniform(k_x, (BATCH, INPUT_SIZE), jnp.float32)

    out = autoencoder_forward(x, packed)
    out = jax.block_until_ready(out)

    assert out.shape == (BATCH, INPUT_SIZE)
    assert bool(jnp.all(jnp.isfinite(out)))
    # Sigmoid output lies in [0, 1].
    assert bool(jnp.all((out >= 0.0) & (out <= 1.0)))

    print("KERNEL_OK")
</pallas_src>

<mosaic_0001>
module attributes {stable_mosaic.version = 11 : i64} {
  func.func @autoencoder_kernel(%arg0: i32, %arg1: memref<8x128xf32, #tpu.memory_space<vmem>>, %arg2: memref<1280x128xbf16, #tpu.memory_space<vmem>>, %arg3: memref<256x256xbf16, #tpu.memory_space<vmem>>, %arg4: memref<16x256xf32, #tpu.memory_space<vmem>>, %arg5: memref<8x128xf32, #tpu.memory_space<vmem>>) attributes {dimension_semantics = [#tpu.dimension_semantics<parallel>], iteration_bounds = array<i64: 1>, scalar_prefetch = 0 : i64, scratch_operands = 0 : i64, tpu.core_type = #tpu.core_type<tc>, window_params = [{transform_indices = @transform_0, window_bounds = array<i64: 8, 128>}, {pipeline_mode = #tpu.pipeline_mode<synchronous>, transform_indices = @transform_1, window_bounds = array<i64: 1280, 128>}, {pipeline_mode = #tpu.pipeline_mode<synchronous>, transform_indices = @transform_2, window_bounds = array<i64: 256, 256>}, {pipeline_mode = #tpu.pipeline_mode<synchronous>, transform_indices = @transform_3, window_bounds = array<i64: 16, 256>}, {transform_indices = @transform_4, window_bounds = array<i64: 8, 128>}]} {
    %c0 = arith.constant 0 : index
    %c0_0 = arith.constant 0 : index
    %0 = vector.load %arg1[%c0, %c0_0] : memref<8x128xf32, #tpu.memory_space<vmem>>, vector<8x128xf32>
    %c0_1 = arith.constant 0 : index
    %c0_2 = arith.constant 0 : index
    %1 = vector.load %arg3[%c0_1, %c0_2] : memref<256x256xbf16, #tpu.memory_space<vmem>>, vector<128x256xbf16>
    %2 = arith.truncf %0 : vector<8x128xf32> to vector<8x128xbf16>
    %cst = arith.constant dense<0.000000e+00> : vector<8x256xf32>
    %3 = tpu.matmul %2, %1, %cst {dimension_numbers = #tpu.dot_dimension_numbers<[1], [0], [0], [1], [0, 0, 1, 1], [], []>} : vector<8x128xbf16>, vector<128x256xbf16>, vector<8x256xf32> -> vector<8x256xf32>
    %c0_3 = arith.constant 0 : index
    %c0_4 = arith.constant 0 : index
    %4 = vector.load %arg4[%c0_3, %c0_4] : memref<16x256xf32, #tpu.memory_space<vmem>>, vector<1x256xf32>
    %5 = vector.broadcast %4 : vector<1x256xf32> to vector<8x256xf32>
    %6 = arith.addf %3, %5 : vector<8x256xf32>
    %cst_5 = arith.constant 0.000000e+00 : f32
    %7 = vector.broadcast %cst_5 : f32 to vector<8x256xf32>
    %8 = arith.maximumf %6, %7 : vector<8x256xf32>
    %c0_6 = arith.constant 0 : index
    %c0_7 = arith.constant 0 : index
    %9 = vector.load %arg2[%c0_6, %c0_7] : memref<1280x128xbf16, #tpu.memory_space<vmem>>, vector<256x128xbf16>
    %10 = arith.truncf %8 : vector<8x256xf32> to vector<8x256xbf16>
    %cst_8 = arith.constant dense<0.000000e+00> : vector<8x128xf32>
    %11 = tpu.matmul %10, %9, %cst_8 {dimension_numbers = #tpu.dot_dimension_numbers<[1], [0], [0], [1], [0, 0, 1, 1], [], []>} : vector<8x256xbf16>, vector<256x128xbf16>, vector<8x128xf32> -> vector<8x128xf32>
    %c1 = arith.constant 1 : index
    %c0_9 = arith.constant 0 : index
    %12 = vector.load %arg4[%c1, %c0_9] : memref<16x256xf32, #tpu.memory_space<vmem>>, vector<1x128xf32>
    %13 = vector.broadcast %12 : vector<1x128xf32> to vector<8x128xf32>
    %14 = arith.addf %11, %13 : vector<8x128xf32>
    %cst_10 = arith.constant 0.000000e+00 : f32
    %15 = vector.broadcast %cst_10 : f32 to vector<8x128xf32>
    %16 = arith.maximumf %14, %15 : vector<8x128xf32>
    %c256 = arith.constant 256 : index
    %c0_11 = arith.constant 0 : index
    %17 = vector.load %arg2[%c256, %c0_11] : memref<1280x128xbf16, #tpu.memory_space<vmem>>, vector<128x128xbf16>
    %18 = arith.truncf %16 : vector<8x128xf32> to vector<8x128xbf16>
    %cst_12 = arith.constant dense<0.000000e+00> : vector<8x128xf32>
    %19 = tpu.matmul %18, %17, %cst_12 {dimension_numbers = #tpu.dot_dimension_numbers<[1], [0], [0], [1], [0, 0, 1, 1], [], []>} : vector<8x128xbf16>, vector<128x128xbf16>, vector<8x128xf32> -> vector<8x128xf32>
    %c2 = arith.constant 2 : index
    %c0_13 = arith.constant 0 : index
    %20 = vector.load %arg4[%c2, %c0_13] : memref<16x256xf32, #tpu.memory_space<vmem>>, vector<1x128xf32>
    %21 = vector.broadcast %20 : vector<1x128xf32> to vector<8x128xf32>
    %22 = arith.addf %19, %21 : vector<8x128xf32>
    %cst_14 = arith.constant 0.000000e+00 : f32
    %23 = vector.broadcast %cst_14 : f32 to vector<8x128xf32>
    %24 = arith.maximumf %22, %23 : vector<8x128xf32>
    %c384 = arith.constant 384 : index
    %c0_15 = arith.constant 0 : index
    %25 = vector.load %arg2[%c384, %c0_15] : memref<1280x128xbf16, #tpu.memory_space<vmem>>, vector<128x128xbf16>
    %26 = arith.truncf %24 : vector<8x128xf32> to vector<8x128xbf16>
    %cst_16 = arith.constant dense<0.000000e+00> : vector<8x128xf32>
    %27 = tpu.matmul %26, %25, %cst_16 {dimension_numbers = #tpu.dot_dimension_numbers<[1], [0], [0], [1], [0, 0, 1, 1], [], []>} : vector<8x128xbf16>, vector<128x128xbf16>, vector<8x128xf32> -> vector<8x128xf32>
    %c3 = arith.constant 3 : index
    %c0_17 = arith.constant 0 : index
    %28 = vector.load %arg4[%c3, %c0_17] : memref<16x256xf32, #tpu.memory_space<vmem>>, vector<1x128xf32>
    %29 = vector.broadcast %28 : vector<1x128xf32> to vector<8x128xf32>
    %30 = arith.addf %27, %29 : vector<8x128xf32>
    %cst_18 = arith.constant 0.000000e+00 : f32
    %31 = vector.broadcast %cst_18 : f32 to vector<8x128xf32>
    %32 = arith.maximumf %30, %31 : vector<8x128xf32>
    %c512 = arith.constant 512 : index
    %c0_19 = arith.constant 0 : index
    %33 = vector.load %arg2[%c512, %c0_19] : memref<1280x128xbf16, #tpu.memory_space<vmem>>, vector<128x128xbf16>
    %34 = arith.truncf %32 : vector<8x128xf32> to vector<8x128xbf16>
    %cst_20 = arith.constant dense<0.000000e+00> : vector<8x128xf32>
    %35 = tpu.matmul %34, %33, %cst_20 {dimension_numbers = #tpu.dot_dimension_numbers<[1], [0], [0], [1], [0, 0, 1, 1], [], []>} : vector<8x128xbf16>, vector<128x128xbf16>, vector<8x128xf32> -> vector<8x128xf32>
    %c4 = arith.constant 4 : index
    %c0_21 = arith.constant 0 : index
    %36 = vector.load %arg4[%c4, %c0_21] : memref<16x256xf32, #tpu.memory_space<vmem>>, vector<1x128xf32>
    %37 = vector.broadcast %36 : vector<1x128xf32> to vector<8x128xf32>
    %38 = arith.addf %35, %37 : vector<8x128xf32>
    %cst_22 = arith.constant 0.000000e+00 : f32
    %39 = vector.broadcast %cst_22 : f32 to vector<8x128xf32>
    %40 = arith.maximumf %38, %39 : vector<8x128xf32>
    %c640 = arith.constant 640 : index
    %c0_23 = arith.constant 0 : index
    %41 = vector.load %arg2[%c640, %c0_23] : memref<1280x128xbf16, #tpu.memory_space<vmem>>, vector<128x128xbf16>
    %42 = arith.truncf %40 : vector<8x128xf32> to vector<8x128xbf16>
    %cst_24 = arith.constant dense<0.000000e+00> : vector<8x128xf32>
    %43 = tpu.matmul %42, %41, %cst_24 {dimension_numbers = #tpu.dot_dimension_numbers<[1], [0], [0], [1], [0, 0, 1, 1], [], []>} : vector<8x128xbf16>, vector<128x128xbf16>, vector<8x128xf32> -> vector<8x128xf32>
    %c5 = arith.constant 5 : index
    %c0_25 = arith.constant 0 : index
    %44 = vector.load %arg4[%c5, %c0_25] : memref<16x256xf32, #tpu.memory_space<vmem>>, vector<1x128xf32>
    %45 = vector.broadcast %44 : vector<1x128xf32> to vector<8x128xf32>
    %46 = arith.addf %43, %45 : vector<8x128xf32>
    %cst_26 = arith.constant 0.000000e+00 : f32
    %47 = vector.broadcast %cst_26 : f32 to vector<8x128xf32>
    %48 = arith.maximumf %46, %47 : vector<8x128xf32>
    %c768 = arith.constant 768 : index
    %c0_27 = arith.constant 0 : index
    %49 = vector.load %arg2[%c768, %c0_27] : memref<1280x128xbf16, #tpu.memory_space<vmem>>, vector<128x128xbf16>
    %50 = arith.truncf %48 : vector<8x128xf32> to vector<8x128xbf16>
    %cst_28 = arith.constant dense<0.000000e+00> : vector<8x128xf32>
    %51 = tpu.matmul %50, %49, %cst_28 {dimension_numbers = #tpu.dot_dimension_numbers<[1], [0], [0], [1], [0, 0, 1, 1], [], []>} : vector<8x128xbf16>, vector<128x128xbf16>, vector<8x128xf32> -> vector<8x128xf32>
    %c6 = arith.constant 6 : index
    %c0_29 = arith.constant 0 : index
    %52 = vector.load %arg4[%c6, %c0_29] : memref<16x256xf32, #tpu.memory_space<vmem>>, vector<1x128xf32>
    %53 = vector.broadcast %52 : vector<1x128xf32> to vector<8x128xf32>
    %54 = arith.addf %51, %53 : vector<8x128xf32>
    %cst_30 = arith.constant 0.000000e+00 : f32
    %55 = vector.broadcast %cst_30 : f32 to vector<8x128xf32>
    %56 = arith.maximumf %54, %55 : vector<8x128xf32>
    %c896 = arith.constant 896 : index
    %c0_31 = arith.constant 0 : index
    %57 = vector.load %arg2[%c896, %c0_31] : memref<1280x128xbf16, #tpu.memory_space<vmem>>, vector<128x128xbf16>
    %58 = arith.truncf %56 : vector<8x128xf32> to vector<8x128xbf16>
    %cst_32 = arith.constant dense<0.000000e+00> : vector<8x128xf32>
    %59 = tpu.matmul %58, %57, %cst_32 {dimension_numbers = #tpu.dot_dimension_numbers<[1], [0], [0], [1], [0, 0, 1, 1], [], []>} : vector<8x128xbf16>, vector<128x128xbf16>, vector<8x128xf32> -> vector<8x128xf32>
    %c7 = arith.constant 7 : index
    %c0_33 = arith.constant 0 : index
    %60 = vector.load %arg4[%c7, %c0_33] : memref<16x256xf32, #tpu.memory_space<vmem>>, vector<1x128xf32>
    %61 = vector.broadcast %60 : vector<1x128xf32> to vector<8x128xf32>
    %62 = arith.addf %59, %61 : vector<8x128xf32>
    %cst_34 = arith.constant 0.000000e+00 : f32
    %63 = vector.broadcast %cst_34 : f32 to vector<8x128xf32>
    %64 = arith.maximumf %62, %63 : vector<8x128xf32>
    %c128 = arith.constant 128 : index
    %c0_35 = arith.constant 0 : index
    %65 = vector.load %arg3[%c128, %c0_35] : memref<256x256xbf16, #tpu.memory_space<vmem>>, vector<128x256xbf16>
    %66 = arith.truncf %64 : vector<8x128xf32> to vector<8x128xbf16>
    %cst_36 = arith.constant dense<0.000000e+00> : vector<8x256xf32>
    %67 = tpu.matmul %66, %65, %cst_36 {dimension_numbers = #tpu.dot_dimension_numbers<[1], [0], [0], [1], [0, 0, 1, 1], [], []>} : vector<8x128xbf16>, vector<128x256xbf16>, vector<8x256xf32> -> vector<8x256xf32>
    %c8 = arith.constant 8 : index
    %c0_37 = arith.constant 0 : index
    %68 = vector.load %arg4[%c8, %c0_37] : memref<16x256xf32, #tpu.memory_space<vmem>>, vector<1x256xf32>
    %69 = vector.broadcast %68 : vector<1x256xf32> to vector<8x256xf32>
    %70 = arith.addf %67, %69 : vector<8x256xf32>
    %cst_38 = arith.constant 0.000000e+00 : f32
    %71 = vector.broadcast %cst_38 : f32 to vector<8x256xf32>
    %72 = arith.maximumf %70, %71 : vector<8x256xf32>
    %c1024 = arith.constant 1024 : index
    %c0_39 = arith.constant 0 : index
    %73 = vector.load %arg2[%c1024, %c0_39] : memref<1280x128xbf16, #tpu.memory_space<vmem>>, vector<256x128xbf16>
    %74 = arith.truncf %72 : vector<8x256xf32> to vector<8x256xbf16>
    %cst_40 = arith.constant dense<0.000000e+00> : vector<8x128xf32>
    %75 = tpu.matmul %74, %73, %cst_40 {dimension_numbers = #tpu.dot_dimension_numbers<[1], [0], [0], [1], [0, 0, 1, 1], [], []>} : vector<8x256xbf16>, vector<256x128xbf16>, vector<8x128xf32> -> vector<8x128xf32>
    %c9 = arith.constant 9 : index
    %c0_41 = arith.constant 0 : index
    %76 = vector.load %arg4[%c9, %c0_41] : memref<16x256xf32, #tpu.memory_space<vmem>>, vector<1x128xf32>
    %77 = vector.broadcast %76 : vector<1x128xf32> to vector<8x128xf32>
    %78 = arith.addf %75, %77 : vector<8x128xf32>
    %cst_42 = arith.constant 5.000000e-01 : f32
    %79 = vector.broadcast %cst_42 : f32 to vector<8x128xf32>
    %80 = arith.mulf %79, %78 : vector<8x128xf32>
    %81 = math.tanh %80 : vector<8x128xf32>
    %cst_43 = arith.constant 1.000000e+00 : f32
    %82 = vector.broadcast %cst_43 : f32 to vector<8x128xf32>
    %83 = arith.addf %81, %82 : vector<8x128xf32>
    %cst_44 = arith.constant 5.000000e-01 : f32
    %84 = vector.broadcast %cst_44 : f32 to vector<8x128xf32>
    %85 = arith.mulf %84, %83 : vector<8x128xf32>
    %c0_45 = arith.constant 0 : index
    %c0_46 = arith.constant 0 : index
    %86 = vector.load %arg5[%c0_45, %c0_46] : memref<8x128xf32, #tpu.memory_space<vmem>>, vector<8x128xf32>
    tpu.vector_store %arg5[%c0_45, %c0_46], %85 {strides = array<i32>} : memref<8x128xf32, #tpu.memory_space<vmem>>, vector<8x128xf32>,
    return
  }
  func.func @transform_0(%arg0: i32) -> (i32, i32) {
    %c0_i32 = arith.constant 0 : i32
    %c0_i32_0 = arith.constant 0 : i32
    return %arg0, %c0_i32 : i32, i32
  }
  func.func @transform_1(%arg0: i32) -> (i32, i32) {
    %c0_i32 = arith.constant 0 : i32
    %c0_i32_0 = arith.constant 0 : i32
    %c0_i32_1 = arith.constant 0 : i32
    return %c0_i32, %c0_i32_0 : i32, i32
  }
  func.func @transform_2(%arg0: i32) -> (i32, i32) {
    %c0_i32 = arith.constant 0 : i32
    %c0_i32_0 = arith.constant 0 : i32
    %c0_i32_1 = arith.constant 0 : i32
    return %c0_i32, %c0_i32_0 : i32, i32
  }
  func.func @transform_3(%arg0: i32) -> (i32, i32) {
    %c0_i32 = arith.constant 0 : i32
    %c0_i32_0 = arith.constant 0 : i32
    %c0_i32_1 = arith.constant 0 : i32
    return %c0_i32, %c0_i32_0 : i32, i32
  }
  func.func @transform_4(%arg0: i32) -> (i32, i32) {
    %c0_i32 = arith.constant 0 : i32
    %c0_i32_0 = arith.constant 0 : i32
    return %arg0, %c0_i32 : i32, i32
  }
}

</mosaic_0001>

<llo_original>
// kernel: tpu_custom_call.1
$region0: #{tpu_custom_call.1}
  #allocation0 [shape = 'u32[]', space=smem, size = 0x4, offset = 0x4, fixed_abs, tag = 'smem constant byte address 0x4 - core index']
  #allocation1 [shape = 'u32[144,128]{1,0:T(1,128)}', space=vmem, size = 0x12000, scoped, tag = 'internal scratch']
  %s0 = inlined_call_operand.hbm [shape: f32[8,128], index: 0, kind: input, shape index: {}]
  %s1 = inlined_call_operand.hbm [shape: bf16[1280,128], index: 1, kind: input, shape index: {}]
  %s2 = inlined_call_operand.hbm [shape: bf16[256,256], index: 2, kind: input, shape index: {}]
  %s3 = inlined_call_operand.hbm [shape: f32[16,256], index: 3, kind: input, shape index: {}]
  %s4 = inlined_call_operand.hbm [shape: f32[8,128], index: 4, kind: output, shape index: {}]
  %s5 = sld [smem:[#allocation0]]
  $region42: #{tpu_custom_call.1} parent=0
    _
  %s7 = ssub.s32 1, %s5
  %s8 = scalar_select 0, %s7, %s5
  $region1: #{tpu_custom_call.1} parent=0
    #allocation2 [shape = 'u8[4096]{0}', space=vmem, size = 0x1000, scoped, tag = 'input window, operand 0, single buffered']
    #allocation3 [shape = 's32[1]{0}', space=sflag, size = 0x4, scoped, tag = 'scoped memory for tpu_custom_call.1']
    #allocation4 [shape = 's32[1]{0}', space=sflag, size = 0x4, scoped, tag = 'scoped memory for tpu_custom_call.1']
    #allocation5 [shape = 'u8[327680]{0}', space=vmem, size = 0x50000, scoped, tag = 'input window, operand 1, single buffered']
    #allocation6 [shape = 's32[1]{0}', space=sflag, size = 0x4, scoped, tag = 'scoped memory for tpu_custom_call.1']
    #allocation7 [shape = 'u8[131072]{0}', space=vmem, size = 0x20000, scoped, tag = 'input window, operand 2, single buffered']
    #allocation8 [shape = 'u8[16384]{0}', space=vmem, size = 0x4000, scoped, tag = 'input window, operand 3, single buffered']
    #allocation9 [shape = 's32[1]{0}', space=sflag, size = 0x4, scoped, tag = 'scoped memory for tpu_custom_call.1']
    #allocation10 [shape = 'u8[4096]{0}', space=vmem, size = 0x1000, scoped, tag = 'output window, operand 0, single buffered']
    %9 = vsyncpa [#allocation3], 0
    %10 = vsyncpa [#allocation6], 0
    %11 = vsyncpa [#allocation9], 0
    %12 = vsyncpa [#allocation4], 0
    // Predicated region
    $region2: #{tpu_custom_call.1} parent=1 // pred_check
      _
    $region3: #{tpu_custom_call.1} parent=1 // pred_check_branch
      %14 = sbr.rel (0) target = $region5
    $region4: #{tpu_custom_call.1} parent=1 // pred_region
      %s16 = ssub.s32 128, 128
      %17 = vsyncadd [#allocation3], %s16
      %s19 = sshll.u32 [#allocation2], 4
      %s20 = int_to_ptr.vmem [resolvable:$true] %s19
      %22 = dma.hbm_to_vmem [thread:$0]  %s0, 128, %s20, [#allocation3]
    $region5: #{tpu_custom_call.1} parent=1 // pred_fallthru
      _
    // Predicated region
    $region6: #{tpu_custom_call.1} parent=1 // pred_check
      _
    $region7: #{tpu_custom_call.1} parent=1 // pred_check_branch
      %24 = sbr.rel (0) target = $region9
    $region8: #{tpu_custom_call.1} parent=1 // pred_region
      %s26 = ssub.s32 10240, 10240
      %27 = vsyncadd [#allocation6], %s26
      %s28 = sshll.u32 [#allocation5], 4
      %s29 = int_to_ptr.vmem [resolvable:$true] %s28
      %34 = dma.hbm_to_vmem [thread:$0]  %s1, 10240, %s29, [#allocation6], 64, 64, 4
    $region9: #{tpu_custom_call.1} parent=1 // pred_fallthru
      _
    // Predicated region
    $region10: #{tpu_custom_call.1} parent=1 // pred_check
      _
    $region11: #{tpu_custom_call.1} parent=1 // pred_check_branch
      %36 = sbr.rel (0) target = $region13
    $region12: #{tpu_custom_call.1} parent=1 // pred_region
      %s38 = ssub.s32 4096, 4096
      %39 = vsyncadd [#allocation6], %s38
      %s40 = sshll.u32 [#allocation7], 4
      %s41 = int_to_ptr.vmem [resolvable:$true] %s40
      %46 = dma.hbm_to_vmem [thread:$0]  %s2, 4096, %s41, [#allocation6], 128, 128, 8
    $region13: #{tpu_custom_call.1} parent=1 // pred_fallthru
      _
    // Predicated region
    $region14: #{tpu_custom_call.1} parent=1 // pred_check
      _
    $region15: #{tpu_custom_call.1} parent=1 // pred_check_branch
      %48 = sbr.rel (0) target = $region17
    $region16: #{tpu_custom_call.1} parent=1 // pred_region
      %s50 = ssub.s32 512, 512
      %51 = vsyncadd [#allocation9], %s50
      %s52 = sshll.u32 [#allocation8], 4
      %s53 = int_to_ptr.vmem [resolvable:$true] %s52
      %58 = dma.hbm_to_vmem [thread:$0]  %s3, 512, %s53, [#allocation9], 256, 256, 16
    $region17: #{tpu_custom_call.1} parent=1 // pred_fallthru
      _
    // Predicated region
    $region18: #{tpu_custom_call.1} parent=1 // pred_check
      _
    $region19: #{tpu_custom_call.1} parent=1 // pred_check_branch
      %60 = sbr.rel (0) target = $region21
    $region20: #{tpu_custom_call.1} parent=1 // pred_region
      %61 = dma.done [#allocation3], 128
    $region21: #{tpu_custom_call.1} parent=1 // pred_fallthru
      _
    // Predicated region
    $region22: #{tpu_custom_call.1} parent=1 // pred_check
      _
    $region23: #{tpu_custom_call.1} parent=1 // pred_check_branch
      %63 = sbr.rel (0) target = $region25
    $region24: #{tpu_custom_call.1} parent=1 // pred_region
      %64 = dma.done [#allocation6], 10240
    $region25: #{tpu_custom_call.1} parent=1 // pred_fallthru
      _
    // Predicated region
    $region26: #{tpu_custom_call.1} parent=1 // pred_check
      _
    $region27: #{tpu_custom_call.1} parent=1 // pred_check_branch
      %66 = sbr.rel (0) target = $region29
    $region28: #{tpu_custom_call.1} parent=1 // pred_region
      %67 = dma.done [#allocation6], 4096
    $region29: #{tpu_custom_call.1} parent=1 // pred_fallthru
      _
    // Predicated region
    $region30: #{tpu_custom_call.1} parent=1 // pred_check
      _
    $region31: #{tpu_custom_call.1} parent=1 // pred_check_branch
      %69 = sbr.rel (0) target = $region33
    $region32: #{tpu_custom_call.1} parent=1 // pred_region
      %70 = dma.done [#allocation9], 512
    $region33: #{tpu_custom_call.1} parent=1 // pred_fallthru
      _
    %v72 = vld [vmem:[#allocation2] sm:$0xff]
    %v73 = vld [vmem:[#allocation7] sm:$0xff]
    %v74 = vld [vmem:[#allocation7 + $0x8] sm:$0xff]
    %v75 = vld [vmem:[#allocation7 + $0x10] sm:$0xff]
    %v76 = vld [vmem:[#allocation7 + $0x18] sm:$0xff]
    %v77 = vld [vmem:[#allocation7 + $0x20] sm:$0xff]
    %v78 = vld [vmem:[#allocation7 + $0x28] sm:$0xff]
    %v79 = vld [vmem:[#allocation7 + $0x30] sm:$0xff]
    %v80 = vld [vmem:[#allocation7 + $0x38] sm:$0xff]
    %v81 = vld [vmem:[#allocation7 + $0x40] sm:$0xff]
    %v82 = vld [vmem:[#allocation7 + $0x48] sm:$0xff]
    %v83 = vld [vmem:[#allocation7 + $0x50] sm:$0xff]
    %v84 = vld [vmem:[#allocation7 + $0x58] sm:$0xff]
    %v85 = vld [vmem:[#allocation7 + $0x60] sm:$0xff]
    %v86 = vld [vmem:[#allocation7 + $0x68] sm:$0xff]
    %v87 = vld [vmem:[#allocation7 + $0x70] sm:$0xff]
    %v88 = vld [vmem:[#allocation7 + $0x78] sm:$0xff]
    %v89 = vpack.c.bf16 %v72, %v72
    %v90 = vld [vmem:[#allocation8] ss:$8 sm:$0x3]
    %v92 = vlaneseq
    %v93 = vshrl.u32 %v92, 7
    %v94 = vsub.s32 0, %v93
    %v95 = vrot.slane %v90, %v94
    %v96 = vlaneseq
    %v97 = vshrl.u32 %v96, 7
    %v98 = vsub.s32 1, %v97
    %v99 = vrot.slane %v90, %v98
    %v118 = vunpack.c.l.b16 %v73
    %v119 = vunpack.c.h.b16 %v73
    %v120 = vunpack.c.l.b16 %v74
    %v121 = vunpack.c.h.b16 %v74
    %v122 = vunpack.c.l.b16 %v75
    %v123 = vunpack.c.h.b16 %v75
    %v124 = vunpack.c.l.b16 %v76
    %v125 = vunpack.c.h.b16 %v76
    %v126 = vunpack.c.l.b16 %v77
    %v127 = vunpack.c.h.b16 %v77
    %v128 = vunpack.c.l.b16 %v78
    %v129 = vunpack.c.h.b16 %v78
    %v130 = vunpack.c.l.b16 %v79
    %v131 = vunpack.c.h.b16 %v79
    %v132 = vunpack.c.l.b16 %v80
    %v133 = vunpack.c.h.b16 %v80
    %v134 = vunpack.c.l.b16 %v81
    %v135 = vunpack.c.h.b16 %v81
    %v136 = vunpack.c.l.b16 %v82
    %v137 = vunpack.c.h.b16 %v82
    %v138 = vunpack.c.l.b16 %v83
    %v139 = vunpack.c.h.b16 %v83
    %v140 = vunpack.c.l.b16 %v84
    %v141 = vunpack.c.h.b16 %v84
    %v142 = vunpack.c.l.b16 %v85
    %v143 = vunpack.c.h.b16 %v85
    %v144 = vunpack.c.l.b16 %v86
    %v145 = vunpack.c.h.b16 %v86
    %v146 = vunpack.c.l.b16 %v87
    %v147 = vunpack.c.h.b16 %v87
    %v148 = vunpack.c.l.b16 %v88
    %v149 = vunpack.c.h.b16 %v88
    %v150 = vpack.c.b16 %v120, %v118
    %v151 = vpack.c.b16 %v121, %v119
    %v152 = vpack.c.b16 %v124, %v122
    %v153 = vpack.c.b16 %v125, %v123
    %v154 = vpack.c.b16 %v128, %v126
    %v155 = vpack.c.b16 %v129, %v127
    %v156 = vpack.c.b16 %v132, %v130
    %v157 = vpack.c.b16 %v133, %v131
    %v158 = vpack.c.b16 %v136, %v134
    %v159 = vpack.c.b16 %v137, %v135
    %v160 = vpack.c.b16 %v140, %v138
    %v161 = vpack.c.b16 %v141, %v139
    %v162 = vpack.c.b16 %v144, %v142
    %v163 = vpack.c.b16 %v145, %v143
    %v164 = vpack.c.b16 %v148, %v146
    %v165 = vpack.c.b16 %v149, %v147
    %182 = vmatprep.subr.bf16.mxu0 %v165
    %183 = vmatpush1.bf16.msra.mxu0 %v164
    %184 = vmatprep.subr.bf16.mxu0 %v163
    %185 = vmatpush1.bf16.msra.mxu0 %v162
    %186 = vmatprep.subr.bf16.mxu0 %v161
    %187 = vmatpush1.bf16.msra.mxu0 %v160
    %188 = vmatprep.subr.bf16.mxu0 %v159
    %189 = vmatpush1.bf16.msra.mxu0 %v158
    %190 = vmatprep.subr.bf16.mxu0 %v157
    %191 = vmatpush1.bf16.msra.mxu0 %v156
    %192 = vmatprep.subr.bf16.mxu0 %v155
    %193 = vmatpush1.bf16.msra.mxu0 %v154
    %194 = vmatprep.subr.bf16.mxu0 %v153
    %195 = vmatpush1.bf16.msra.mxu0 %v152
    %196 = vmatprep.subr.bf16.mxu0 %v151
    %197 = vmatpush1.bf16.msra.mxu0 %v150
    %198 = vmatprep.subr.bf16.mxu0 0
    %199 = vmatpush2.bf16.msra.mxu0 0
    %200 = vmatprep.subr.bf16.mxu0 0
    %201 = vmatpush2.bf16.msra.mxu0 0
    %202 = vmatprep.subr.bf16.mxu0 0
    %203 = vmatpush2.bf16.msra.mxu0 0
    %204 = vmatprep.subr.bf16.mxu0 0
    %205 = vmatpush2.bf16.msra.mxu0 0
    %206 = vmatprep.subr.bf16.mxu0 0
    %207 = vmatpush2.bf16.msra.mxu0 0
    %208 = vmatprep.subr.bf16.mxu0 0
    %209 = vmatpush2.bf16.msra.mxu0 0
    %210 = vmatprep.subr.bf16.mxu0 0
    %211 = vmatpush2.bf16.msra.mxu0 0
    %212 = vmatprep.subr.bf16.mxu0 0
    %213 = vmatpush2.bf16.msra.mxu0 0
    %214 = vmatprep.mubr.bf16.mxu0 0
    %215 = vmatmul.mubr.bf16.gmra.mxu0 %v89
    %v216 = vpop.f32.mrf.mxu0
    %v217 = vadd.f32 %v95, %v216
    %v218 = vpop.f32.mrf.mxu0
    %v219 = vadd.f32 %v99, %v218
    %v220 = vpop.f32.mrf.mxu0
    %v221 = vpop.f32.mrf.mxu0
    %222 = vdwg.mxu0
    %v223 = vmax.f32 %v217, 0.0
    %v224 = vmax.f32 %v219, 0.0
    %v225 = vld [vmem:[#allocation5] sm:$0xf]
    %v226 = vld [vmem:[#allocation5 + $0x4] sm:$0xf]
    %v227 = vld [vmem:[#allocation5 + $0x8] sm:$0xf]
    %v228 = vld [vmem:[#allocation5 + $0xc] sm:$0xf]
    %v229 = vld [vmem:[#allocation5 + $0x10] sm:$0xf]
    %v230 = vld [vmem:[#allocation5 + $0x14] sm:$0xf]
    %v231 = vld [vmem:[#allocation5 + $0x18] sm:$0xf]
    %v232 = vld [vmem:[#allocation5 + $0x1c] sm:$0xf]
    %v233 = vld [vmem:[#allocation5 + $0x20] sm:$0xf]
    %v234 = vld [vmem:[#allocation5 + $0x24] sm:$0xf]
    %v235 = vld [vmem:[#allocation5 + $0x28] sm:$0xf]
    %v236 = vld [vmem:[#allocation5 + $0x2c] sm:$0xf]
    %v237 = vld [vmem:[#allocation5 + $0x30] sm:$0xf]
    %v238 = vld [vmem:[#allocation5 + $0x34] sm:$0xf]
    %v239 = vld [vmem:[#allocation5 + $0x38] sm:$0xf]
    %v240 = vld [vmem:[#allocation5 + $0x3c] sm:$0xf]
    %v241 = vld [vmem:[#allocation5 + $0x40] sm:$0xf]
    %v242 = vld [vmem:[#allocation5 + $0x44] sm:$0xf]
    %v243 = vld [vmem:[#allocation5 + $0x48] sm:$0xf]
    %v244 = vld [vmem:[#allocation5 + $0x4c] sm:$0xf]
    %v245 = vld [vmem:[#allocation5 + $0x50] sm:$0xf]
    %v246 = vld [vmem:[#allocation5 + $0x54] sm:$0xf]
    %v247 = vld [vmem:[#allocation5 + $0x58] sm:$0xf]
    %v248 = vld [vmem:[#allocation5 + $0x5c] sm:$0xf]
    %v249 = vld [vmem:[#allocation5 + $0x60] sm:$0xf]
    %v250 = vld [vmem:[#allocation5 + $0x64] sm:$0xf]
    %v251 = vld [vmem:[#allocation5 + $0x68] sm:$0xf]
    %v252 = vld [vmem:[#allocation5 + $0x6c] sm:$0xf]
    %v253 = vld [vmem:[#allocation5 + $0x70] sm:$0xf]
    %v254 = vld [vmem:[#allocation5 + $0x74] sm:$0xf]
    %v255 = vld [vmem:[#allocation5 + $0x78] sm:$0xf]
    %v256 = vld [vmem:[#allocation5 + $0x7c] sm:$0xf]
    %v257 = vpack.c.bf16 %v223, %v223
    %v258 = vpack.c.bf16 %v224, %v224
    %v259 = vld [vmem:[#allocation8 + $0x1] ss:$0 sm:$0xff]
    %v292 = vunpack.c.l.b16 %v225
    %v293 = vunpack.c.l.b16 %v226
    %v294 = vunpack.c.l.b16 %v227
    %v295 = vunpack.c.l.b16 %v228
    %v296 = vunpack.c.l.b16 %v229
    %v297 = vunpack.c.l.b16 %v230
    %v298 = vunpack.c.l.b16 %v231
    %v299 = vunpack.c.l.b16 %v232
    %v300 = vunpack.c.l.b16 %v233
    %v301 = vunpack.c.l.b16 %v234
    %v302 = vunpack.c.l.b16 %v235
    %v303 = vunpack.c.l.b16 %v236
    %v304 = vunpack.c.l.b16 %v237
    %v305 = vunpack.c.l.b16 %v238
    %v306 = vunpack.c.l.b16 %v239
    %v307 = vunpack.c.l.b16 %v240
    %v308 = vunpack.c.l.b16 %v241
    %v309 = vunpack.c.l.b16 %v242
    %v310 = vunpack.c.l.b16 %v243
    %v311 = vunpack.c.l.b16 %v244
    %v312 = vunpack.c.l.b16 %v245
    %v313 = vunpack.c.l.b16 %v246
    %v314 = vunpack.c.l.b16 %v247
    %v315 = vunpack.c.l.b16 %v248
    %v316 = vunpack.c.l.b16 %v249
    %v317 = vunpack.c.l.b16 %v250
    %v318 = vunpack.c.l.b16 %v251
    %v319 = vunpack.c.l.b16 %v252
    %v320 = vunpack.c.l.b16 %v253
    %v321 = vunpack.c.l.b16 %v254
    %v322 = vunpack.c.l.b16 %v255
    %v323 = vunpack.c.l.b16 %v256
    %v324 = vpack.c.b16 %v293, %v292
    %v325 = vpack.c.b16 %v295, %v294
    %v326 = vpack.c.b16 %v297, %v296
    %v327 = vpack.c.b16 %v299, %v298
    %v328 = vpack.c.b16 %v301, %v300
    %v329 = vpack.c.b16 %v303, %v302
    %v330 = vpack.c.b16 %v305, %v304
    %v331 = vpack.c.b16 %v307, %v306
    %v332 = vpack.c.b16 %v309, %v308
    %v333 = vpack.c.b16 %v311, %v310
    %v334 = vpack.c.b16 %v313, %v312
    %v335 = vpack.c.b16 %v315, %v314
    %v336 = vpack.c.b16 %v317, %v316
    %v337 = vpack.c.b16 %v319, %v318
    %v338 = vpack.c.b16 %v321, %v320
    %v339 = vpack.c.b16 %v323, %v322
    %356 = vmatprep.subr.bf16.mxu0 0
    %357 = vmatpush1.bf16.msra.mxu0 %v331
    %358 = vmatprep.subr.bf16.mxu0 0
    %359 = vmatpush1.bf16.msra.mxu0 %v330
    %360 = vmatprep.subr.bf16.mxu0 0
    %361 = vmatpush1.bf16.msra.mxu0 %v329
    %362 = vmatprep.subr.bf16.mxu0 0
    %363 = vmatpush1.bf16.msra.mxu0 %v328
    %364 = vmatprep.subr.bf16.mxu0 0
    %365 = vmatpush1.bf16.msra.mxu0 %v327
    %366 = vmatprep.subr.bf16.mxu0 0
    %367 = vmatpush1.bf16.msra.mxu0 %v326
    %368 = vmatprep.subr.bf16.mxu0 0
    %369 = vmatpush1.bf16.msra.mxu0 %v325
    %370 = vmatprep.subr.bf16.mxu0 0
    %371 = vmatpush1.bf16.msra.mxu0 %v324
    %372 = vmatprep.subr.bf16.mxu0 0
    %373 = vmatpush2.bf16.msra.mxu0 %v339
    %374 = vmatprep.subr.bf16.mxu0 0
    %375 = vmatpush2.bf16.msra.mxu0 %v338
    %376 = vmatprep.subr.bf16.mxu0 0
    %377 = vmatpush2.bf16.msra.mxu0 %v337
    %378 = vmatprep.subr.bf16.mxu0 0
    %379 = vmatpush2.bf16.msra.mxu0 %v336
    %380 = vmatprep.subr.bf16.mxu0 0
    %381 = vmatpush2.bf16.msra.mxu0 %v335
    %382 = vmatprep.subr.bf16.mxu0 0
    %383 = vmatpush2.bf16.msra.mxu0 %v334
    %384 = vmatprep.subr.bf16.mxu0 0
    %385 = vmatpush2.bf16.msra.mxu0 %v333
    %386 = vmatprep.subr.bf16.mxu0 0
    %387 = vmatpush2.bf16.msra.mxu0 %v332
    %388 = vmatprep.mubr.bf16.mxu0 %v258
    %389 = vmatmul.mubr.bf16.gmra.mxu0 %v257
    %v390 = vpop.f32.mrf.mxu0
    %v391 = vadd.f32 %v259, %v390
    %v392 = vpop.f32.mrf.mxu0
    %v393 = vpop.f32.mrf.mxu0
    %v394 = vpop.f32.mrf.mxu0
    %395 = vdwg.mxu0
    %v396 = vmax.f32 %v391, 0.0
    %v397 = vld [vmem:[#allocation5 + $0x80] sm:$0xf]
    %v398 = vld [vmem:[#allocation5 + $0x84] sm:$0xf]
    %v399 = vld [vmem:[#allocation5 + $0x88] sm:$0xf]
    %v400 = vld [vmem:[#allocation5 + $0x8c] sm:$0xf]
    %v401 = vld [vmem:[#allocation5 + $0x90] sm:$0xf]
    %v402 = vld [vmem:[#allocation5 + $0x94] sm:$0xf]
    %v403 = vld [vmem:[#allocation5 + $0x98] sm:$0xf]
    %v404 = vld [vmem:[#allocation5 + $0x9c] sm:$0xf]
    %v405 = vld [vmem:[#allocation5 + $0xa0] sm:$0xf]
    %v406 = vld [vmem:[#allocation5 + $0xa4] sm:$0xf]
    %v407 = vld [vmem:[#allocation5 + $0xa8] sm:$0xf]
    %v408 = vld [vmem:[#allocation5 + $0xac] sm:$0xf]
    %v409 = vld [vmem:[#allocation5 + $0xb0] sm:$0xf]
    %v410 = vld [vmem:[#allocation5 + $0xb4] sm:$0xf]
    %v411 = vld [vmem:[#allocation5 + $0xb8] sm:$0xf]
    %v412 = vld [vmem:[#allocation5 + $0xbc] sm:$0xf]
    %v413 = vpack.c.bf16 %v396, %v396
    %v414 = vld [vmem:[#allocation8 + $0x2] ss:$0 sm:$0xff]
    %v431 = vunpack.c.l.b16 %v397
    %v432 = vunpack.c.l.b16 %v398
    %v433 = vunpack.c.l.b16 %v399
    %v434 = vunpack.c.l.b16 %v400
    %v435 = vunpack.c.l.b16 %v401
    %v436 = vunpack.c.l.b16 %v402
    %v437 = vunpack.c.l.b16 %v403
    %v438 = vunpack.c.l.b16 %v404
    %v439 = vunpack.c.l.b16 %v405
    %v440 = vunpack.c.l.b16 %v406
    %v441 = vunpack.c.l.b16 %v407
    %v442 = vunpack.c.l.b16 %v408
    %v443 = vunpack.c.l.b16 %v409
    %v444 = vunpack.c.l.b16 %v410
    %v445 = vunpack.c.l.b16 %v411
    %v446 = vunpack.c.l.b16 %v412
    %v447 = vpack.c.b16 %v432, %v431
    %v448 = vpack.c.b16 %v434, %v433
    %v449 = vpack.c.b16 %v436, %v435
    %v450 = vpack.c.b16 %v438, %v437
    %v451 = vpack.c.b16 %v440, %v439
    %v452 = vpack.c.b16 %v442, %v441
    %v453 = vpack.c.b16 %v444, %v443
    %v454 = vpack.c.b16 %v446, %v445
    %463 = vmatprep.subr.bf16.mxu0 0
    %464 = vmatpush1.bf16.msra.mxu0 %v454
    %465 = vmatprep.subr.bf16.mxu0 0
    %466 = vmatpush1.bf16.msra.mxu0 %v453
    %467 = vmatprep.subr.bf16.mxu0 0
    %468 = vmatpush1.bf16.msra.mxu0 %v452
    %469 = vmatprep.subr.bf16.mxu0 0
    %470 = vmatpush1.bf16.msra.mxu0 %v451
    %471 = vmatprep.subr.bf16.mxu0 0
    %472 = vmatpush1.bf16.msra.mxu0 %v450
    %473 = vmatprep.subr.bf16.mxu0 0
    %474 = vmatpush1.bf16.msra.mxu0 %v449
    %475 = vmatprep.subr.bf16.mxu0 0
    %476 = vmatpush1.bf16.msra.mxu0 %v448
    %477 = vmatprep.subr.bf16.mxu0 0
    %478 = vmatpush1.bf16.msra.mxu0 %v447
    %479 = vmatprep.subr.bf16.mxu0 0
    %480 = vmatpush2.bf16.msra.mxu0 0
    %481 = vmatprep.subr.bf16.mxu0 0
    %482 = vmatpush2.bf16.msra.mxu0 0
    %483 = vmatprep.subr.bf16.mxu0 0
    %484 = vmatpush2.bf16.msra.mxu0 0
    %485 = vmatprep.subr.bf16.mxu0 0
    %486 = vmatpush2.bf16.msra.mxu0 0
    %487 = vmatprep.subr.bf16.mxu0 0
    %488 = vmatpush2.bf16.msra.mxu0 0
    %489 = vmatprep.subr.bf16.mxu0 0
    %490 = vmatpush2.bf16.msra.mxu0 0
    %491 = vmatprep.subr.bf16.mxu0 0
    %492 = vmatpush2.bf16.msra.mxu0 0
    %493 = vmatprep.subr.bf16.mxu0 0
    %494 = vmatpush2.bf16.msra.mxu0 0
    %495 = vmatprep.mubr.bf16.mxu0 0
    %496 = vmatmul.mubr.bf16.gmra.mxu0 %v413
    %v497 = vpop.f32.mrf.mxu0
    %v498 = vadd.f32 %v414, %v497
    %v499 = vpop.f32.mrf.mxu0
    %v500 = vpop.f32.mrf.mxu0
    %v501 = vpop.f32.mrf.mxu0
    %502 = vdwg.mxu0
    %v503 = vmax.f32 %v498, 0.0
    %v504 = vld [vmem:[#allocation5 + $0xc0] sm:$0xf]
    %v505 = vld [vmem:[#allocation5 + $0xc4] sm:$0xf]
    %v506 = vld [vmem:[#allocation5 + $0xc8] sm:$0xf]
    %v507 = vld [vmem:[#allocation5 + $0xcc] sm:$0xf]
    %v508 = vld [vmem:[#allocation5 + $0xd0] sm:$0xf]
    %v509 = vld [vmem:[#allocation5 + $0xd4] sm:$0xf]
    %v510 = vld [vmem:[#allocation5 + $0xd8] sm:$0xf]
    %v511 = vld [vmem:[#allocation5 + $0xdc] sm:$0xf]
    %v512 = vld [vmem:[#allocation5 + $0xe0] sm:$0xf]
    %v513 = vld [vmem:[#allocation5 + $0xe4] sm:$0xf]
    %v514 = vld [vmem:[#allocation5 + $0xe8] sm:$0xf]
    %v515 = vld [vmem:[#allocation5 + $0xec] sm:$0xf]
    %v516 = vld [vmem:[#allocation5 + $0xf0] sm:$0xf]
    %v517 = vld [vmem:[#allocation5 + $0xf4] sm:$0xf]
    %v518 = vld [vmem:[#allocation5 + $0xf8] sm:$0xf]
    %v519 = vld [vmem:[#allocation5 + $0xfc] sm:$0xf]
    %v520 = vpack.c.bf16 %v503, %v503
    %v521 = vld [vmem:[#allocation8 + $0x3] ss:$0 sm:$0xff]
    %v538 = vunpack.c.l.b16 %v504
    %v539 = vunpack.c.l.b16 %v505
    %v540 = vunpack.c.l.b16 %v506
    %v541 = vunpack.c.l.b16 %v507
    %v542 = vunpack.c.l.b16 %v508
    %v543 = vunpack.c.l.b16 %v509
    %v544 = vunpack.c.l.b16 %v510
    %v545 = vunpack.c.l.b16 %v511
    %v546 = vunpack.c.l.b16 %v512
    %v547 = vunpack.c.l.b16 %v513
    %v548 = vunpack.c.l.b16 %v514
    %v549 = vunpack.c.l.b16 %v515
    %v550 = vunpack.c.l.b16 %v516
    %v551 = vunpack.c.l.b16 %v517
    %v552 = vunpack.c.l.b16 %v518
    %v553 = vunpack.c.l.b16 %v519
    %v554 = vpack.c.b16 %v539, %v538
    %v555 = vpack.c.b16 %v541, %v540
    %v556 = vpack.c.b16 %v543, %v542
    %v557 = vpack.c.b16 %v545, %v544
    %v558 = vpack.c.b16 %v547, %v546
    %v559 = vpack.c.b16 %v549, %v548
    %v560 = vpack.c.b16 %v551, %v550
    %v561 = vpack.c.b16 %v553, %v552
    %570 = vmatprep.subr.bf16.mxu0 0
    %571 = vmatpush1.bf16.msra.mxu0 %v561
    %572 = vmatprep.subr.bf16.mxu0 0
    %573 = vmatpush1.bf16.msra.mxu0 %v560
    %574 = vmatprep.subr.bf16.mxu0 0
    %575 = vmatpush1.bf16.msra.mxu0 %v559
    %576 = vmatprep.subr.bf16.mxu0 0
    %577 = vmatpush1.bf16.msra.mxu0 %v558
    %578 = vmatprep.subr.bf16.mxu0 0
    %579 = vmatpush1.bf16.msra.mxu0 %v557
    %580 = vmatprep.subr.bf16.mxu0 0
    %581 = vmatpush1.bf16.msra.mxu0 %v556
    %582 = vmatprep.subr.bf16.mxu0 0
    %583 = vmatpush1.bf16.msra.mxu0 %v555
    %584 = vmatprep.subr.bf16.mxu0 0
    %585 = vmatpush1.bf16.msra.mxu0 %v554
    %586 = vmatprep.subr.bf16.mxu0 0
    %587 = vmatpush2.bf16.msra.mxu0 0
    %588 = vmatprep.subr.bf16.mxu0 0
    %589 = vmatpush2.bf16.msra.mxu0 0
    %590 = vmatprep.subr.bf16.mxu0 0
    %591 = vmatpush2.bf16.msra.mxu0 0
    %592 = vmatprep.subr.bf16.mxu0 0
    %593 = vmatpush2.bf16.msra.mxu0 0
    %594 = vmatprep.subr.bf16.mxu0 0
    %595 = vmatpush2.bf16.msra.mxu0 0
    %596 = vmatprep.subr.bf16.mxu0 0
    %597 = vmatpush2.bf16.msra.mxu0 0
    %598 = vmatprep.subr.bf16.mxu0 0
    %599 = vmatpush2.bf16.msra.mxu0 0
    %600 = vmatprep.subr.bf16.mxu0 0
    %601 = vmatpush2.bf16.msra.mxu0 0
    %602 = vmatprep.mubr.bf16.mxu0 0
    %603 = vmatmul.mubr.bf16.gmra.mxu0 %v520
    %v604 = vpop.f32.mrf.mxu0
    %v605 = vadd.f32 %v521, %v604
    %v606 = vpop.f32.mrf.mxu0
    %v607 = vpop.f32.mrf.mxu0
    %v608 = vpop.f32.mrf.mxu0
    %609 = vdwg.mxu0
    %v610 = vmax.f32 %v605, 0.0
    %v611 = vld [vmem:[#allocation5 + $0x100] sm:$0xf]
    %v612 = vld [vmem:[#allocation5 + $0x104] sm:$0xf]
    %v613 = vld [vmem:[#allocation5 + $0x108] sm:$0xf]
    %v614 = vld [vmem:[#allocation5 + $0x10c] sm:$0xf]
    %v615 = vld [vmem:[#allocation5 + $0x110] sm:$0xf]
    %v616 = vld [vmem:[#allocation5 + $0x114] sm:$0xf]
    %v617 = vld [vmem:[#allocation5 + $0x118] sm:$0xf]
    %v618 = vld [vmem:[#allocation5 + $0x11c] sm:$0xf]
    %v619 = vld [vmem:[#allocation5 + $0x120] sm:$0xf]
    %v620 = vld [vmem:[#allocation5 + $0x124] sm:$0xf]
    %v621 = vld [vmem:[#allocation5 + $0x128] sm:$0xf]
    %v622 = vld [vmem:[#allocation5 + $0x12c] sm:$0xf]
    %v623 = vld [vmem:[#allocation5 + $0x130] sm:$0xf]
    %v624 = vld [vmem:[#allocation5 + $0x134] sm:$0xf]
    %v625 = vld [vmem:[#allocation5 + $0x138] sm:$0xf]
    %v626 = vld [vmem:[#allocation5 + $0x13c] sm:$0xf]
    %v627 = vpack.c.bf16 %v610, %v610
    %v628 = vld [vmem:[#allocation8 + $0x4] ss:$0 sm:$0xff]
    %v645 = vunpack.c.l.b16 %v611
    %v646 = vunpack.c.l.b16 %v612
    %v647 = vunpack.c.l.b16 %v613
    %v648 = vunpack.c.l.b16 %v614
    %v649 = vunpack.c.l.b16 %v615
    %v650 = vunpack.c.l.b16 %v616
    %v651 = vunpack.c.l.b16 %v617
    %v652 = vunpack.c.l.b16 %v618
    %v653 = vunpack.c.l.b16 %v619
    %v654 = vunpack.c.l.b16 %v620
    %v655 = vunpack.c.l.b16 %v621
    %v656 = vunpack.c.l.b16 %v622
    %v657 = vunpack.c.l.b16 %v623
    %v658 = vunpack.c.l.b16 %v624
    %v659 = vunpack.c.l.b16 %v625
    %v660 = vunpack.c.l.b16 %v626
    %v661 = vpack.c.b16 %v646, %v645
    %v662 = vpack.c.b16 %v648, %v647
    %v663 = vpack.c.b16 %v650, %v649
    %v664 = vpack.c.b16 %v652, %v651
    %v665 = vpack.c.b16 %v654, %v653
    %v666 = vpack.c.b16 %v656, %v655
    %v667 = vpack.c.b16 %v658, %v657
    %v668 = vpack.c.b16 %v660, %v659
    %677 = vmatprep.subr.bf16.mxu0 0
    %678 = vmatpush1.bf16.msra.mxu0 %v668
    %679 = vmatprep.subr.bf16.mxu0 0
    %680 = vmatpush1.bf16.msra.mxu0 %v667
    %681 = vmatprep.subr.bf16.mxu0 0
    %682 = vmatpush1.bf16.msra.mxu0 %v666
    %683 = vmatprep.subr.bf16.mxu0 0
    %684 = vmatpush1.bf16.msra.mxu0 %v665
    %685 = vmatprep.subr.bf16.mxu0 0
    %686 = vmatpush1.bf16.msra.mxu0 %v664
    %687 = vmatprep.subr.bf16.mxu0 0
    %688 = vmatpush1.bf16.msra.mxu0 %v663
    %689 = vmatprep.subr.bf16.mxu0 0
    %690 = vmatpush1.bf16.msra.mxu0 %v662
    %691 = vmatprep.subr.bf16.mxu0 0
    %692 = vmatpush1.bf16.msra.mxu0 %v661
    %693 = vmatprep.subr.bf16.mxu0 0
    %694 = vmatpush2.bf16.msra.mxu0 0
    %695 = vmatprep.subr.bf16.mxu0 0
    %696 = vmatpush2.bf16.msra.mxu0 0
    %697 = vmatprep.subr.bf16.mxu0 0
    %698 = vmatpush2.bf16.msra.mxu0 0
    %699 = vmatprep.subr.bf16.mxu0 0
    %700 = vmatpush2.bf16.msra.mxu0 0
    %701 = vmatprep.subr.bf16.mxu0 0
    %702 = vmatpush2.bf16.msra.mxu0 0
    %703 = vmatprep.subr.bf16.mxu0 0
    %704 = vmatpush2.bf16.msra.mxu0 0
    %705 = vmatprep.subr.bf16.mxu0 0
    %706 = vmatpush2.bf16.msra.mxu0 0
    %707 = vmatprep.subr.bf16.mxu0 0
    %708 = vmatpush2.bf16.msra.mxu0 0
    %709 = vmatprep.mubr.bf16.mxu0 0
    %710 = vmatmul.mubr.bf16.gmra.mxu0 %v627
    %v711 = vpop.f32.mrf.mxu0
    %v712 = vadd.f32 %v628, %v711
    %v713 = vpop.f32.mrf.mxu0
    %v714 = vpop.f32.mrf.mxu0
    %v715 = vpop.f32.mrf.mxu0
    %716 = vdwg.mxu0
    %v717 = vmax.f32 %v712, 0.0
    %v718 = vld [vmem:[#allocation5 + $0x140] sm:$0xf]
    %v719 = vld [vmem:[#allocation5 + $0x144] sm:$0xf]
    %v720 = vld [vmem:[#allocation5 + $0x148] sm:$0xf]
    %v721 = vld [vmem:[#allocation5 + $0x14c] sm:$0xf]
    %v722 = vld [vmem:[#allocation5 + $0x150] sm:$0xf]
    %v723 = vld [vmem:[#allocation5 + $0x154] sm:$0xf]
    %v724 = vld [vmem:[#allocation5 + $0x158] sm:$0xf]
    %v725 = vld [vmem:[#allocation5 + $0x15c] sm:$0xf]
    %v726 = vld [vmem:[#allocation5 + $0x160] sm:$0xf]
    %v727 = vld [vmem:[#allocation5 + $0x164] sm:$0xf]
    %v728 = vld [vmem:[#allocation5 + $0x168] sm:$0xf]
    %v729 = vld [vmem:[#allocation5 + $0x16c] sm:$0xf]
    %v730 = vld [vmem:[#allocation5 + $0x170] sm:$0xf]
    %v731 = vld [vmem:[#allocation5 + $0x174] sm:$0xf]
    %v732 = vld [vmem:[#allocation5 + $0x178] sm:$0xf]
    %v733 = vld [vmem:[#allocation5 + $0x17c] sm:$0xf]
    %v734 = vpack.c.bf16 %v717, %v717
    %v735 = vld [vmem:[#allocation8 + $0x5] ss:$0 sm:$0xff]
    %v752 = vunpack.c.l.b16 %v718
    %v753 = vunpack.c.l.b16 %v719
    %v754 = vunpack.c.l.b16 %v720
    %v755 = vunpack.c.l.b16 %v721
    %v756 = vunpack.c.l.b16 %v722
    %v757 = vunpack.c.l.b16 %v723
    %v758 = vunpack.c.l.b16 %v724
    %v759 = vunpack.c.l.b16 %v725
    %v760 = vunpack.c.l.b16 %v726
    %v761 = vunpack.c.l.b16 %v727
    %v762 = vunpack.c.l.b16 %v728
    %v763 = vunpack.c.l.b16 %v729
    %v764 = vunpack.c.l.b16 %v730
    %v765 = vunpack.c.l.b16 %v731
    %v766 = vunpack.c.l.b16 %v732
    %v767 = vunpack.c.l.b16 %v733
    %v768 = vpack.c.b16 %v753, %v752
    %v769 = vpack.c.b16 %v755, %v754
    %v770 = vpack.c.b16 %v757, %v756
    %v771 = vpack.c.b16 %v759, %v758
    %v772 = vpack.c.b16 %v761, %v760
    %v773 = vpack.c.b16 %v763, %v762
    %v774 = vpack.c.b16 %v765, %v764
    %v775 = vpack.c.b16 %v767, %v766
    %784 = vmatprep.subr.bf16.mxu0 0
    %785 = vmatpush1.bf16.msra.mxu0 %v775
    %786 = vmatprep.subr.bf16.mxu0 0
    %787 = vmatpush1.bf16.msra.mxu0 %v774
    %788 = vmatprep.subr.bf16.mxu0 0
    %789 = vmatpush1.bf16.msra.mxu0 %v773
    %790 = vmatprep.subr.bf16.mxu0 0
    %791 = vmatpush1.bf16.msra.mxu0 %v772
    %792 = vmatprep.subr.bf16.mxu0 0
    %793 = vmatpush1.bf16.msra.mxu0 %v771
    %794 = vmatprep.subr.bf16.mxu0 0
    %795 = vmatpush1.bf16.msra.mxu0 %v770
    %796 = vmatprep.subr.bf16.mxu0 0
    %797 = vmatpush1.bf16.msra.mxu0 %v769
    %798 = vmatprep.subr.bf16.mxu0 0
    %799 = vmatpush1.bf16.msra.mxu0 %v768
    %800 = vmatprep.subr.bf16.mxu0 0
    %801 = vmatpush2.bf16.msra.mxu0 0
    %802 = vmatprep.subr.bf16.mxu0 0
    %803 = vmatpush2.bf16.msra.mxu0 0
    %804 = vmatprep.subr.bf16.mxu0 0
    %805 = vmatpush2.bf16.msra.mxu0 0
    %806 = vmatprep.subr.bf16.mxu0 0
    %807 = vmatpush2.bf16.msra.mxu0 0
    %808 = vmatprep.subr.bf16.mxu0 0
    %809 = vmatpush2.bf16.msra.mxu0 0
    %810 = vmatprep.subr.bf16.mxu0 0
    %811 = vmatpush2.bf16.msra.mxu0 0
    %812 = vmatprep.subr.bf16.mxu0 0
    %813 = vmatpush2.bf16.msra.mxu0 0
    %814 = vmatprep.subr.bf16.mxu0 0
    %815 = vmatpush2.bf16.msra.mxu0 0
    %816 = vmatprep.mubr.bf16.mxu0 0
    %817 = vmatmul.mubr.bf16.gmra.mxu0 %v734
    %v818 = vpop.f32.mrf.mxu0
    %v819 = vadd.f32 %v735, %v818
    %v820 = vpop.f32.mrf.mxu0
    %v821 = vpop.f32.mrf.mxu0
    %v822 = vpop.f32.mrf.mxu0
    %823 = vdwg.mxu0
    %v824 = vmax.f32 %v819, 0.0
    %v825 = vld [vmem:[#allocation5 + $0x180] sm:$0xf]
    %v826 = vld [vmem:[#allocation5 + $0x184] sm:$0xf]
    %v827 = vld [vmem:[#allocation5 + $0x188] sm:$0xf]
    %v828 = vld [vmem:[#allocation5 + $0x18c] sm:$0xf]
    %v829 = vld [vmem:[#allocation5 + $0x190] sm:$0xf]
    %v830 = vld [vmem:[#allocation5 + $0x194] sm:$0xf]
    %v831 = vld [vmem:[#allocation5 + $0x198] sm:$0xf]
    %v832 = vld [vmem:[#allocation5 + $0x19c] sm:$0xf]
    %v833 = vld [vmem:[#allocation5 + $0x1a0] sm:$0xf]
    %v834 = vld [vmem:[#allocation5 + $0x1a4] sm:$0xf]
    %v835 = vld [vmem:[#allocation5 + $0x1a8] sm:$0xf]
    %v836 = vld [vmem:[#allocation5 + $0x1ac] sm:$0xf]
    %v837 = vld [vmem:[#allocation5 + $0x1b0] sm:$0xf]
    %v838 = vld [vmem:[#allocation5 + $0x1b4] sm:$0xf]
    %v839 = vld [vmem:[#allocation5 + $0x1b8] sm:$0xf]
    %v840 = vld [vmem:[#allocation5 + $0x1bc] sm:$0xf]
    %v841 = vpack.c.bf16 %v824, %v824
    %v842 = vld [vmem:[#allocation8 + $0x6] ss:$0 sm:$0xff]
    %v859 = vunpack.c.l.b16 %v825
    %v860 = vunpack.c.l.b16 %v826
    %v861 = vunpack.c.l.b16 %v827
    %v862 = vunpack.c.l.b16 %v828
    %v863 = vunpack.c.l.b16 %v829
    %v864 = vunpack.c.l.b16 %v830
    %v865 = vunpack.c.l.b16 %v831
    %v866 = vunpack.c.l.b16 %v832
    %v867 = vunpack.c.l.b16 %v833
    %v868 = vunpack.c.l.b16 %v834
    %v869 = vunpack.c.l.b16 %v835
    %v870 = vunpack.c.l.b16 %v836
    %v871 = vunpack.c.l.b16 %v837
    %v872 = vunpack.c.l.b16 %v838
    %v873 = vunpack.c.l.b16 %v839
    %v874 = vunpack.c.l.b16 %v840
    %v875 = vpack.c.b16 %v860, %v859
    %v876 = vpack.c.b16 %v862, %v861
    %v877 = vpack.c.b16 %v864, %v863
    %v878 = vpack.c.b16 %v866, %v865
    %v879 = vpack.c.b16 %v868, %v867
    %v880 = vpack.c.b16 %v870, %v869
    %v881 = vpack.c.b16 %v872, %v871
    %v882 = vpack.c.b16 %v874, %v873
    %891 = vmatprep.subr.bf16.mxu0 0
    %892 = vmatpush1.bf16.msra.mxu0 %v882
    %893 = vmatprep.subr.bf16.mxu0 0
    %894 = vmatpush1.bf16.msra.mxu0 %v881
    %895 = vmatprep.subr.bf16.mxu0 0
    %896 = vmatpush1.bf16.msra.mxu0 %v880
    %897 = vmatprep.subr.bf16.mxu0 0
    %898 = vmatpush1.bf16.msra.mxu0 %v879
    %899 = vmatprep.subr.bf16.mxu0 0
    %900 = vmatpush1.bf16.msra.mxu0 %v878
    %901 = vmatprep.subr.bf16.mxu0 0
    %902 = vmatpush1.bf16.msra.mxu0 %v877
    %903 = vmatprep.subr.bf16.mxu0 0
    %904 = vmatpush1.bf16.msra.mxu0 %v876
    %905 = vmatprep.subr.bf16.mxu0 0
    %906 = vmatpush1.bf16.msra.mxu0 %v875
    %907 = vmatprep.subr.bf16.mxu0 0
    %908 = vmatpush2.bf16.msra.mxu0 0
    %909 = vmatprep.subr.bf16.mxu0 0
    %910 = vmatpush2.bf16.msra.mxu0 0
    %911 = vmatprep.subr.bf16.mxu0 0
    %912 = vmatpush2.bf16.msra.mxu0 0
    %913 = vmatprep.subr.bf16.mxu0 0
    %914 = vmatpush2.bf16.msra.mxu0 0
    %915 = vmatprep.subr.bf16.mxu0 0
    %916 = vmatpush2.bf16.msra.mxu0 0
    %917 = vmatprep.subr.bf16.mxu0 0
    %918 = vmatpush2.bf16.msra.mxu0 0
    %919 = vmatprep.subr.bf16.mxu0 0
    %920 = vmatpush2.bf16.msra.mxu0 0
    %921 = vmatprep.subr.bf16.mxu0 0
    %922 = vmatpush2.bf16.msra.mxu0 0
    %923 = vmatprep.mubr.bf16.mxu0 0
    %924 = vmatmul.mubr.bf16.gmra.mxu0 %v841
    %v925 = vpop.f32.mrf.mxu0
    %v926 = vadd.f32 %v842, %v925
    %v927 = vpop.f32.mrf.mxu0
    %v928 = vpop.f32.mrf.mxu0
    %v929 = vpop.f32.mrf.mxu0
    %930 = vdwg.mxu0
    %v931 = vmax.f32 %v926, 0.0
    %v932 = vld [vmem:[#allocation5 + $0x1c0] sm:$0xf]
    %v933 = vld [vmem:[#allocation5 + $0x1c4] sm:$0xf]
    %v934 = vld [vmem:[#allocation5 + $0x1c8] sm:$0xf]
    %v935 = vld [vmem:[#allocation5 + $0x1cc] sm:$0xf]
    %v936 = vld [vmem:[#allocation5 + $0x1d0] sm:$0xf]
    %v937 = vld [vmem:[#allocation5 + $0x1d4] sm:$0xf]
    %v938 = vld [vmem:[#allocation5 + $0x1d8] sm:$0xf]
    %v939 = vld [vmem:[#allocation5 + $0x1dc] sm:$0xf]
    %v940 = vld [vmem:[#allocation5 + $0x1e0] sm:$0xf]
    %v941 = vld [vmem:[#allocation5 + $0x1e4] sm:$0xf]
    %v942 = vld [vmem:[#allocation5 + $0x1e8] sm:$0xf]
    %v943 = vld [vmem:[#allocation5 + $0x1ec] sm:$0xf]
    %v944 = vld [vmem:[#allocation5 + $0x1f0] sm:$0xf]
    %v945 = vld [vmem:[#allocation5 + $0x1f4] sm:$0xf]
    %v946 = vld [vmem:[#allocation5 + $0x1f8] sm:$0xf]
    %v947 = vld [vmem:[#allocation5 + $0x1fc] sm:$0xf]
    %v948 = vpack.c.bf16 %v931, %v931
    %v949 = vld [vmem:[#allocation8 + $0x7] ss:$0 sm:$0xff]
    %v966 = vunpack.c.l.b16 %v932
    %v967 = vunpack.c.l.b16 %v933
    %v968 = vunpack.c.l.b16 %v934
    %v969 = vunpack.c.l.b16 %v935
    %v970 = vunpack.c.l.b16 %v936
    %v971 = vunpack.c.l.b16 %v937
    %v972 = vunpack.c.l.b16 %v938
    %v973 = vunpack.c.l.b16 %v939
    %v974 = vunpack.c.l.b16 %v940
    %v975 = vunpack.c.l.b16 %v941
    %v976 = vunpack.c.l.b16 %v942
    %v977 = vunpack.c.l.b16 %v943
    %v978 = vunpack.c.l.b16 %v944
    %v979 = vunpack.c.l.b16 %v945
    %v980 = vunpack.c.l.b16 %v946
    %v981 = vunpack.c.l.b16 %v947
    %v982 = vpack.c.b16 %v967, %v966
    %v983 = vpack.c.b16 %v969, %v968
    %v984 = vpack.c.b16 %v971, %v970
    %v985 = vpack.c.b16 %v973, %v972
    %v986 = vpack.c.b16 %v975, %v974
    %v987 = vpack.c.b16 %v977, %v976
    %v988 = vpack.c.b16 %v979, %v978
    %v989 = vpack.c.b16 %v981, %v980
    %998 = vmatprep.subr.bf16.mxu0 0
    %999 = vmatpush1.bf16.msra.mxu0 %v989
    %1000 = vmatprep.subr.bf16.mxu0 0
    %1001 = vmatpush1.bf16.msra.mxu0 %v988
    %1002 = vmatprep.subr.bf16.mxu0 0
    %1003 = vmatpush1.bf16.msra.mxu0 %v987
    %1004 = vmatprep.subr.bf16.mxu0 0
    %1005 = vmatpush1.bf16.msra.mxu0 %v986
    %1006 = vmatprep.subr.bf16.mxu0 0
    %1007 = vmatpush1.bf16.msra.mxu0 %v985
    %1008 = vmatprep.subr.bf16.mxu0 0
    %1009 = vmatpush1.bf16.msra.mxu0 %v984
    %1010 = vmatprep.subr.bf16.mxu0 0
    %1011 = vmatpush1.bf16.msra.mxu0 %v983
    %1012 = vmatprep.subr.bf16.mxu0 0
    %1013 = vmatpush1.bf16.msra.mxu0 %v982
    %1014 = vmatprep.subr.bf16.mxu0 0
    %1015 = vmatpush2.bf16.msra.mxu0 0
    %1016 = vmatprep.subr.bf16.mxu0 0
    %1017 = vmatpush2.bf16.msra.mxu0 0
    %1018 = vmatprep.subr.bf16.mxu0 0
    %1019 = vmatpush2.bf16.msra.mxu0 0
    %1020 = vmatprep.subr.bf16.mxu0 0
    %1021 = vmatpush2.bf16.msra.mxu0 0
    %1022 = vmatprep.subr.bf16.mxu0 0
    %1023 = vmatpush2.bf16.msra.mxu0 0
    %1024 = vmatprep.subr.bf16.mxu0 0
    %1025 = vmatpush2.bf16.msra.mxu0 0
    %1026 = vmatprep.subr.bf16.mxu0 0
    %1027 = vmatpush2.bf16.msra.mxu0 0
    %1028 = vmatprep.subr.bf16.mxu0 0
    %1029 = vmatpush2.bf16.msra.mxu0 0
    %1030 = vmatprep.mubr.bf16.mxu0 0
    %1031 = vmatmul.mubr.bf16.gmra.mxu0 %v948
    %v1032 = vpop.f32.mrf.mxu0
    %v1033 = vadd.f32 %v949, %v1032
    %v1034 = vpop.f32.mrf.mxu0
    %v1035 = vpop.f32.mrf.mxu0
    %v1036 = vpop.f32.mrf.mxu0
    %1037 = vdwg.mxu0
    %v1038 = vmax.f32 %v1033, 0.0
    %v1039 = vld [vmem:[#allocation7 + $0x80] sm:$0xff]
    %v1040 = vld [vmem:[#allocation7 + $0x88] sm:$0xff]
    %v1041 = vld [vmem:[#allocation7 + $0x90] sm:$0xff]
    %v1042 = vld [vmem:[#allocation7 + $0x98] sm:$0xff]
    %v1043 = vld [vmem:[#allocation7 + $0xa0] sm:$0xff]
    %v1044 = vld [vmem:[#allocation7 + $0xa8] sm:$0xff]
    %v1045 = vld [vmem:[#allocation7 + $0xb0] sm:$0xff]
    %v1046 = vld [vmem:[#allocation7 + $0xb8] sm:$0xff]
    %v1047 = vld [vmem:[#allocation7 + $0xc0] sm:$0xff]
    %v1048 = vld [vmem:[#allocation7 + $0xc8] sm:$0xff]
    %v1049 = vld [vmem:[#allocation7 + $0xd0] sm:$0xff]
    %v1050 = vld [vmem:[#allocation7 + $0xd8] sm:$0xff]
    %v1051 = vld [vmem:[#allocation7 + $0xe0] sm:$0xff]
    %v1052 = vld [vmem:[#allocation7 + $0xe8] sm:$0xff]
    %v1053 = vld [vmem:[#allocation7 + $0xf0] sm:$0xff]
    %v1054 = vld [vmem:[#allocation7 + $0xf8] sm:$0xff]
    %v1055 = vpack.c.bf16 %v1038, %v1038
    %s1056 = scalar_lea.vmem [#allocation8], 16
    %v1057 = vld [vmem:[%s1056] ss:$8 sm:$0x3]
    %v1059 = vlaneseq
    %v1060 = vshrl.u32 %v1059, 7
    %v1061 = vsub.s32 0, %v1060
    %v1062 = vrot.slane %v1057, %v1061
    %v1063 = vlaneseq
    %v1064 = vshrl.u32 %v1063, 7
    %v1065 = vsub.s32 1, %v1064
    %v1066 = vrot.slane %v1057, %v1065
    %v1085 = vunpack.c.l.b16 %v1039
    %v1086 = vunpack.c.h.b16 %v1039
    %v1087 = vunpack.c.l.b16 %v1040
    %v1088 = vunpack.c.h.b16 %v1040
    %v1089 = vunpack.c.l.b16 %v1041
    %v1090 = vunpack.c.h.b16 %v1041
    %v1091 = vunpack.c.l.b16 %v1042
    %v1092 = vunpack.c.h.b16 %v1042
    %v1093 = vunpack.c.l.b16 %v1043
    %v1094 = vunpack.c.h.b16 %v1043
    %v1095 = vunpack.c.l.b16 %v1044
    %v1096 = vunpack.c.h.b16 %v1044
    %v1097 = vunpack.c.l.b16 %v1045
    %v1098 = vunpack.c.h.b16 %v1045
    %v1099 = vunpack.c.l.b16 %v1046
    %v1100 = vunpack.c.h.b16 %v1046
    %v1101 = vunpack.c.l.b16 %v1047
    %v1102 = vunpack.c.h.b16 %v1047
    %v1103 = vunpack.c.l.b16 %v1048
    %v1104 = vunpack.c.h.b16 %v1048
    %v1105 = vunpack.c.l.b16 %v1049
    %v1106 = vunpack.c.h.b16 %v1049
    %v1107 = vunpack.c.l.b16 %v1050
    %v1108 = vunpack.c.h.b16 %v1050
    %v1109 = vunpack.c.l.b16 %v1051
    %v1110 = vunpack.c.h.b16 %v1051
    %v1111 = vunpack.c.l.b16 %v1052
    %v1112 = vunpack.c.h.b16 %v1052
    %v1113 = vunpack.c.l.b16 %v1053
    %v1114 = vunpack.c.h.b16 %v1053
    %v1115 = vunpack.c.l.b16 %v1054
    %v1116 = vunpack.c.h.b16 %v1054
    %v1117 = vpack.c.b16 %v1087, %v1085
    %v1118 = vpack.c.b16 %v1088, %v1086
    %v1119 = vpack.c.b16 %v1091, %v1089
    %v1120 = vpack.c.b16 %v1092, %v1090
    %v1121 = vpack.c.b16 %v1095, %v1093
    %v1122 = vpack.c.b16 %v1096, %v1094
    %v1123 = vpack.c.b16 %v1099, %v1097
    %v1124 = vpack.c.b16 %v1100, %v1098
    %v1125 = vpack.c.b16 %v1103, %v1101
    %v1126 = vpack.c.b16 %v1104, %v1102
    %v1127 = vpack.c.b16 %v1107, %v1105
    %v1128 = vpack.c.b16 %v1108, %v1106
    %v1129 = vpack.c.b16 %v1111, %v1109
    %v1130 = vpack.c.b16 %v1112, %v1110
    %v1131 = vpack.c.b16 %v1115, %v1113
    %v1132 = vpack.c.b16 %v1116, %v1114
    %1149 = vmatprep.subr.bf16.mxu0 %v1132
    %1150 = vmatpush1.bf16.msra.mxu0 %v1131
    %1151 = vmatprep.subr.bf16.mxu0 %v1130
    %1152 = vmatpush1.bf16.msra.mxu0 %v1129
    %1153 = vmatprep.subr.bf16.mxu0 %v1128
    %1154 = vmatpush1.bf16.msra.mxu0 %v1127
    %1155 = vmatprep.subr.bf16.mxu0 %v1126
    %1156 = vmatpush1.bf16.msra.mxu0 %v1125
    %1157 = vmatprep.subr.bf16.mxu0 %v1124
    %1158 = vmatpush1.bf16.msra.mxu0 %v1123
    %1159 = vmatprep.subr.bf16.mxu0 %v1122
    %1160 = vmatpush1.bf16.msra.mxu0 %v1121
    %1161 = vmatprep.subr.bf16.mxu0 %v1120
    %1162 = vmatpush1.bf16.msra.mxu0 %v1119
    %1163 = vmatprep.subr.bf16.mxu0 %v1118
    %1164 = vmatpush1.bf16.msra.mxu0 %v1117
    %1165 = vmatprep.subr.bf16.mxu0 0
    %1166 = vmatpush2.bf16.msra.mxu0 0
    %1167 = vmatprep.subr.bf16.mxu0 0
    %1168 = vmatpush2.bf16.msra.mxu0 0
    %1169 = vmatprep.subr.bf16.mxu0 0
    %1170 = vmatpush2.bf16.msra.mxu0 0
    %1171 = vmatprep.subr.bf16.mxu0 0
    %1172 = vmatpush2.bf16.msra.mxu0 0
    %1173 = vmatprep.subr.bf16.mxu0 0
    %1174 = vmatpush2.bf16.msra.mxu0 0
    %1175 = vmatprep.subr.bf16.mxu0 0
    %1176 = vmatpush2.bf16.msra.mxu0 0
    %1177 = vmatprep.subr.bf16.mxu0 0
    %1178 = vmatpush2.bf16.msra.mxu0 0
    %1179 = vmatprep.subr.bf16.mxu0 0
    %1180 = vmatpush2.bf16.msra.mxu0 0
    %1181 = vmatprep.mubr.bf16.mxu0 0
    %1182 = vmatmul.mubr.bf16.gmra.mxu0 %v1055
    %v1183 = vpop.f32.mrf.mxu0
    %v1184 = vadd.f32 %v1062, %v1183
    %v1185 = vpop.f32.mrf.mxu0
    %v1186 = vadd.f32 %v1066, %v1185
    %v1187 = vpop.f32.mrf.mxu0
    %v1188 = vpop.f32.mrf.mxu0
    %1189 = vdwg.mxu0
    %v1190 = vmax.f32 %v1184, 0.0
    %v1191 = vmax.f32 %v1186, 0.0
    %v1192 = vld [vmem:[#allocation5 + $0x200] sm:$0xf]
    %v1193 = vld [vmem:[#allocation5 + $0x204] sm:$0xf]
    %v1194 = vld [vmem:[#allocation5 + $0x208] sm:$0xf]
    %v1195 = vld [vmem:[#allocation5 + $0x20c] sm:$0xf]
    %v1196 = vld [vmem:[#allocation5 + $0x210] sm:$0xf]
    %v1197 = vld [vmem:[#allocation5 + $0x214] sm:$0xf]
    %v1198 = vld [vmem:[#allocation5 + $0x218] sm:$0xf]
    %v1199 = vld [vmem:[#allocation5 + $0x21c] sm:$0xf]
    %v1200 = vld [vmem:[#allocation5 + $0x220] sm:$0xf]
    %v1201 = vld [vmem:[#allocation5 + $0x224] sm:$0xf]
    %v1202 = vld [vmem:[#allocation5 + $0x228] sm:$0xf]
    %v1203 = vld [vmem:[#allocation5 + $0x22c] sm:$0xf]
    %v1204 = vld [vmem:[#allocation5 + $0x230] sm:$0xf]
    %v1205 = vld [vmem:[#allocation5 + $0x234] sm:$0xf]
    %v1206 = vld [vmem:[#allocation5 + $0x238] sm:$0xf]
    %v1207 = vld [vmem:[#allocation5 + $0x23c] sm:$0xf]
    %v1208 = vld [vmem:[#allocation5 + $0x240] sm:$0xf]
    %v1209 = vld [vmem:[#allocation5 + $0x244] sm:$0xf]
    %v1210 = vld [vmem:[#allocation5 + $0x248] sm:$0xf]
    %v1211 = vld [vmem:[#allocation5 + $0x24c] sm:$0xf]
    %v1212 = vld [vmem:[#allocation5 + $0x250] sm:$0xf]
    %v1213 = vld [vmem:[#allocation5 + $0x254] sm:$0xf]
    %v1214 = vld [vmem:[#allocation5 + $0x258] sm:$0xf]
    %v1215 = vld [vmem:[#allocation5 + $0x25c] sm:$0xf]
    %v1216 = vld [vmem:[#allocation5 + $0x260] sm:$0xf]
    %v1217 = vld [vmem:[#allocation5 + $0x264] sm:$0xf]
    %v1218 = vld [vmem:[#allocation5 + $0x268] sm:$0xf]
    %v1219 = vld [vmem:[#allocation5 + $0x26c] sm:$0xf]
    %v1220 = vld [vmem:[#allocation5 + $0x270] sm:$0xf]
    %v1221 = vld [vmem:[#allocation5 + $0x274] sm:$0xf]
    %v1222 = vld [vmem:[#allocation5 + $0x278] sm:$0xf]
    %v1223 = vld [vmem:[#allocation5 + $0x27c] sm:$0xf]
    %v1224 = vpack.c.bf16 %v1190, %v1190
    %v1225 = vpack.c.bf16 %v1191, %v1191
    %v1226 = vld [vmem:[#allocation8 + $0x11] ss:$0 sm:$0xff]
    %v1259 = vunpack.c.l.b16 %v1192
    %v1260 = vunpack.c.l.b16 %v1193
    %v1261 = vunpack.c.l.b16 %v1194
    %v1262 = vunpack.c.l.b16 %v1195
    %v1263 = vunpack.c.l.b16 %v1196
    %v1264 = vunpack.c.l.b16 %v1197
    %v1265 = vunpack.c.l.b16 %v1198
    %v1266 = vunpack.c.l.b16 %v1199
    %v1267 = vunpack.c.l.b16 %v1200
    %v1268 = vunpack.c.l.b16 %v1201
    %v1269 = vunpack.c.l.b16 %v1202
    %v1270 = vunpack.c.l.b16 %v1203
    %v1271 = vunpack.c.l.b16 %v1204
    %v1272 = vunpack.c.l.b16 %v1205
    %v1273 = vunpack.c.l.b16 %v1206
    %v1274 = vunpack.c.l.b16 %v1207
    %v1275 = vunpack.c.l.b16 %v1208
    %v1276 = vunpack.c.l.b16 %v1209
    %v1277 = vunpack.c.l.b16 %v1210
    %v1278 = vunpack.c.l.b16 %v1211
    %v1279 = vunpack.c.l.b16 %v1212
    %v1280 = vunpack.c.l.b16 %v1213
    %v1281 = vunpack.c.l.b16 %v1214
    %v1282 = vunpack.c.l.b16 %v1215
    %v1283 = vunpack.c.l.b16 %v1216
    %v1284 = vunpack.c.l.b16 %v1217
    %v1285 = vunpack.c.l.b16 %v1218
    %v1286 = vunpack.c.l.b16 %v1219
    %v1287 = vunpack.c.l.b16 %v1220
    %v1288 = vunpack.c.l.b16 %v1221
    %v1289 = vunpack.c.l.b16 %v1222
    %v1290 = vunpack.c.l.b16 %v1223
    %v1291 = vpack.c.b16 %v1260, %v1259
    %v1292 = vpack.c.b16 %v1262, %v1261
    %v1293 = vpack.c.b16 %v1264, %v1263
    %v1294 = vpack.c.b16 %v1266, %v1265
    %v1295 = vpack.c.b16 %v1268, %v1267
    %v1296 = vpack.c.b16 %v1270, %v1269
    %v1297 = vpack.c.b16 %v1272, %v1271
    %v1298 = vpack.c.b16 %v1274, %v1273
    %v1299 = vpack.c.b16 %v1276, %v1275
    %v1300 = vpack.c.b16 %v1278, %v1277
    %v1301 = vpack.c.b16 %v1280, %v1279
    %v1302 = vpack.c.b16 %v1282, %v1281
    %v1303 = vpack.c.b16 %v1284, %v1283
    %v1304 = vpack.c.b16 %v1286, %v1285
    %v1305 = vpack.c.b16 %v1288, %v1287
    %v1306 = vpack.c.b16 %v1290, %v1289
    %1323 = vmatprep.subr.bf16.mxu0 0
    %1324 = vmatpush1.bf16.msra.mxu0 %v1298
    %1325 = vmatprep.subr.bf16.mxu0 0
    %1326 = vmatpush1.bf16.msra.mxu0 %v1297
    %1327 = vmatprep.subr.bf16.mxu0 0
    %1328 = vmatpush1.bf16.msra.mxu0 %v1296
    %1329 = vmatprep.subr.bf16.mxu0 0
    %1330 = vmatpush1.bf16.msra.mxu0 %v1295
    %1331 = vmatprep.subr.bf16.mxu0 0
    %1332 = vmatpush1.bf16.msra.mxu0 %v1294
    %1333 = vmatprep.subr.bf16.mxu0 0
    %1334 = vmatpush1.bf16.msra.mxu0 %v1293
    %1335 = vmatprep.subr.bf16.mxu0 0
    %1336 = vmatpush1.bf16.msra.mxu0 %v1292
    %1337 = vmatprep.subr.bf16.mxu0 0
    %1338 = vmatpush1.bf16.msra.mxu0 %v1291
    %1339 = vmatprep.subr.bf16.mxu0 0
    %1340 = vmatpush2.bf16.msra.mxu0 %v1306
    %1341 = vmatprep.subr.bf16.mxu0 0
    %1342 = vmatpush2.bf16.msra.mxu0 %v1305
    %1343 = vmatprep.subr.bf16.mxu0 0
    %1344 = vmatpush2.bf16.msra.mxu0 %v1304
    %1345 = vmatprep.subr.bf16.mxu0 0
    %1346 = vmatpush2.bf16.msra.mxu0 %v1303
    %1347 = vmatprep.subr.bf16.mxu0 0
    %1348 = vmatpush2.bf16.msra.mxu0 %v1302
    %1349 = vmatprep.subr.bf16.mxu0 0
    %1350 = vmatpush2.bf16.msra.mxu0 %v1301
    %1351 = vmatprep.subr.bf16.mxu0 0
    %1352 = vmatpush2.bf16.msra.mxu0 %v1300
    %1353 = vmatprep.subr.bf16.mxu0 0
    %1354 = vmatpush2.bf16.msra.mxu0 %v1299
    %1355 = vmatprep.mubr.bf16.mxu0 %v1225
    %1356 = vmatmul.mubr.bf16.gmra.mxu0 %v1224
    %v1357 = vpop.f32.mrf.mxu0
    %v1358 = vadd.f32 %v1226, %v1357
    %v1359 = vpop.f32.mrf.mxu0
    %v1360 = vpop.f32.mrf.mxu0
    %v1361 = vpop.f32.mrf.mxu0
    %1362 = vdwg.mxu0
    %v1363 = vmul.f32 %v1358, 0.5
    %v1364 = vtanh.pop %v1363
    %v1365 = vadd.f32 %v1364, 1.0
    %v1366 = vmul.f32 %v1365, 0.5
    %1367 = vst [vmem:[#allocation10] sm:$0xff] %v1366
    // Predicated region
    $region34: #{tpu_custom_call.1} parent=1 // pred_check
      _
    $region35: #{tpu_custom_call.1} parent=1 // pred_check_branch
      %1369 = sbr.rel (0) target = $region37
    $region36: #{tpu_custom_call.1} parent=1 // pred_region
      %s1371 = ssub.s32 128, 128
      %1372 = vsyncadd [#allocation4], %s1371
      %s1374 = sshll.u32 [#allocation10], 4
      %s1375 = int_to_ptr.vmem [resolvable:$true] %s1374
      %1377 = dma.vmem_to_hbm [thread:$0]  %s1375, 128, %s4, [#allocation4]
    $region37: #{tpu_custom_call.1} parent=1 // pred_fallthru
      _
    // Predicated region
    $region38: #{tpu_custom_call.1} parent=1 // pred_check
      _
    $region39: #{tpu_custom_call.1} parent=1 // pred_check_branch
      %1379 = sbr.rel (0) target = $region41
    $region40: #{tpu_custom_call.1} parent=1 // pred_region
      %1380 = dma.done [#allocation4], 128
    $region41: #{tpu_custom_call.1} parent=1 // pred_fallthru
      _
    %1381 = vsyncpa [#allocation3], 1
    %1382 = vsyncpa [#allocation6], 1
    %1383 = vsyncpa [#allocation9], 1
    %1384 = vsyncpa [#allocation4], 1

</llo_original>
